<compile_context>
chip_gen: v6e
topology: v6e:2x2x1
jax: 0.10.0
libtpu: 0.0.40
codegen_flags: <defaults>
</compile_context>

<pallas_src>
import functools

import jax
import jax.numpy as jnp
import numpy as np
from jax.experimental import pallas as pl
from jax.experimental.pallas import tpu as pltpu


def _round_up(x, m):
    return (x + m - 1) // m * m


# ---------------------------------------------------------------------------
# Fast bounded-range sine (f32).  SIREN pre-activations are O(10..100) rad, so a
# two-constant Cody-Waite reduction in f32 plus an odd degree-11 Taylor poly on
# [-pi/2, pi/2] is accurate to ~1e-6 — far below bf16/activation noise.
# ---------------------------------------------------------------------------
_INV_PI = np.float32(1.0 / np.pi)
_PI_HI = np.float32(3.140625)                      # exact in a few bits
_PI_LO = np.float32(np.pi - 3.140625)
_C3 = np.float32(-1.0 / 6.0)
_C5 = np.float32(1.0 / 120.0)
_C7 = np.float32(-1.0 / 5040.0)
_C9 = np.float32(1.0 / 362880.0)
_C11 = np.float32(-1.0 / 39916800.0)


def _fast_sin_f32(x):
    # k = nearest integer to x/pi  (sin(x) = (-1)^k * sin(x - k*pi), exact identity)
    k = jnp.floor(x * _INV_PI + np.float32(0.5))
    r = (x - k * _PI_HI) - k * _PI_LO                # r in ~[-pi/2, pi/2], f32
    r2 = r * r
    p = _C11
    p = p * r2 + _C9
    p = p * r2 + _C7
    p = p * r2 + _C5
    p = p * r2 + _C3
    s = r + r * (r2 * p)
    half = k * np.float32(0.5)
    odd = half != jnp.floor(half)                    # parity of k (k exact in f32)
    return jnp.where(odd, -s, s)


# ---------------------------------------------------------------------------
# Kernels (omega_0 already folded into W / b, so epilogue is bias-add + sin only)
# ---------------------------------------------------------------------------
def _siren_kernel_bias(x_ref, w_ref, b_ref, o_ref, *, approx_sin):
    xv = x_ref[...]
    if xv.dtype != w_ref.dtype:
        xv = xv.astype(w_ref.dtype)                  # in-kernel cast, hidden by pipeline
    acc = jnp.dot(xv, w_ref[...], preferred_element_type=jnp.float32)
    acc = acc + b_ref[...]                           # (1, bn) f32 broadcasts over rows
    s = _fast_sin_f32(acc) if approx_sin else jnp.sin(acc)
    o_ref[...] = s.astype(o_ref.dtype)


def _siren_kernel_nobias(x_ref, w_ref, o_ref, *, approx_sin):
    xv = x_ref[...]
    if xv.dtype != w_ref.dtype:
        xv = xv.astype(w_ref.dtype)
    acc = jnp.dot(xv, w_ref[...], preferred_element_type=jnp.float32)
    s = _fast_sin_f32(acc) if approx_sin else jnp.sin(acc)
    o_ref[...] = s.astype(o_ref.dtype)


# ---------------------------------------------------------------------------
# Parameter prep (ONCE per layer): fold omega_0, pre-transpose, optional bf16.
# Keep layer 0 (coordinate layer) in float32; bf16 is for hidden layers.
# ---------------------------------------------------------------------------
def prepare_siren_params(weight, bias, *, omega_0=30.0, compute_dtype=jnp.float32):
    """weight: (D_out, D_in) torch layout; bias: (D_out,) or None."""
    w_t = (jnp.asarray(weight, jnp.float32) * omega_0).T.astype(compute_dtype)
    if bias is None:
        b = None
    else:
        b = (jnp.asarray(bias, jnp.float32) * omega_0).reshape(1, -1)   # stays f32
    return w_t, b


# ---------------------------------------------------------------------------
# Forward: y = sin(x @ W_scaled + b_scaled) == sin(omega_0 * (x @ W^T + b))
# ---------------------------------------------------------------------------
def siren_layer(x, w_t, b=None, *, block_m=2048, block_n=2048,
                out_dtype=None, approx_sin=True):
    """x: (N, D_in); w_t: (D_in, D_out) pre-scaled/transposed; b: (1, D_out) f32 or None."""
    N, d_in = x.shape
    assert w_t.shape[0] == d_in
    d_out = w_t.shape[1]
    has_bias = b is not None
    compute_dtype = w_t.dtype
    out_dtype = compute_dtype if out_dtype is None else out_dtype

    # Tile sizes: cover the full dim when it fits in one block (so the block's
    # last dims equal the full array dims), otherwise 8/128-aligned tiles with
    # ragged trailing blocks handled by Pallas masking (no wrapper pad/slice).
    block_m_r = _round_up(max(int(block_m), 8), 8)
    block_n_r = _round_up(max(int(block_n), 128), 128)
    bm = block_m_r if N > block_m_r else N
    bn = block_n_r if d_out > block_n_r else d_out

    x_item = jnp.dtype(x.dtype).itemsize
    w_item = jnp.dtype(compute_dtype).itemsize
    o_item = jnp.dtype(out_dtype).itemsize

    def vmem_need(bm_, bn_):
        return (2 * bm_ * d_in * x_item                      # x tiles (double-buffered)
                + 2 * d_in * bn_ * w_item                    # weight tiles
                + (2 * bn_ * 4 if has_bias else 0)           # bias tiles (f32)
                + 2 * bm_ * bn_ * o_item)                    # output tiles

    try:
        vmem_cap = int(pltpu.get_tpu_info().vmem_capacity_bytes)
    except Exception:
        vmem_cap = 64 << 20                                  # conservative (v7x)
    budget = min(vmem_cap * 3 // 4, 100 << 20)

    # Shrink tiles (rows first) rather than overshooting the generation's VMEM.
    while vmem_need(bm, bn) > budget and bm > 512:
        bm = max(512, _round_up(bm // 2, 8))
    while vmem_need(bm, bn) > budget and bn > 128:
        bn = max(128, _round_up(bn // 2, 128))

    n_m = pl.cdiv(N, bm)
    n_n = pl.cdiv(d_out, bn)

    cp = dict(dimension_semantics=("parallel", "parallel"))
    need = vmem_need(bm, bn)
    if need > (12 << 20):
        limit = min(need * 5 // 4 + (2 << 20), vmem_cap * 9 // 10)
        cp["vmem_limit_bytes"] = int(max(limit, need + (1 << 20)))

    in_specs = [
        pl.BlockSpec((bm, d_in), lambda i, j: (i, 0)),       # x tile (native dtype)
        pl.BlockSpec((d_in, bn), lambda i, j: (0, j)),       # weight; constant index when
    ]                                                        #   n_n == 1 -> fetched once
    args = [x, w_t]
    if has_bias:
        in_specs.append(pl.BlockSpec((1, bn), lambda i, j: (0, j)))
        args.append(b)
        kernel = functools.partial(_siren_kernel_bias, approx_sin=approx_sin)
    else:
        kernel = functools.partial(_siren_kernel_nobias, approx_sin=approx_sin)

    return pl.pallas_call(
        kernel,
        out_shape=jax.ShapeDtypeStruct((N, d_out), out_dtype),
        grid_spec=pltpu.PrefetchScalarGridSpec(
            num_scalar_prefetch=0,
            grid=(n_m, n_n),
            in_specs=in_specs,
            out_specs=pl.BlockSpec((bm, bn), lambda i, j: (i, j)),
        ),
        compiler_params=pltpu.CompilerParams(**cp),
    )(*args)


# ---------------------------------------------------------------------------
# Init matching SirenLayer.init_weights (bias keeps torch Linear default init).
# ---------------------------------------------------------------------------
def init_siren_params(key, in_features, out_features, *, is_first=False, omega_0=30.0):
    kw, kb = jax.random.split(key)
    if is_first:
        bound_w = 1.0 / in_features
    else:
        bound_w = np.sqrt(6.0 / in_features) / omega_0
    weight = jax.random.uniform(
        kw, (out_features, in_features), jnp.float32, minval=-bound_w, maxval=bound_w)
    bound_b = 1.0 / np.sqrt(in_features)
    bias = jax.random.uniform(
        kb, (out_features,), jnp.float32, minval=-bound_b, maxval=bound_b)
    return weight, bias


if __name__ == "__main__":
    key = jax.random.PRNGKey(0)
    kx1, kp1, kx2, kp2, kx3, kp3 = jax.random.split(key, 6)
    omega_0 = 30.0

    # --- Case A: first SIREN layer (coords -> features), f32 everywhere --------
    N, D_in, D_out = 64, 3, 64
    x = jax.random.normal(kx1, (N, D_in), jnp.float32)
    W, bvec = init_siren_params(kp1, D_in, D_out, is_first=True, omega_0=omega_0)
    w_t, b2 = prepare_siren_params(W, bvec, omega_0=omega_0, compute_dtype=jnp.float32)
    out = jax.block_until_ready(siren_layer(x, w_t, b2))
    ref = jnp.sin(omega_0 * (x @ W.T + bvec))
    np.testing.assert_allclose(np.asarray(out), np.asarray(ref), atol=1e-4, rtol=1e-4)

    # --- Case B: hidden layer, bf16 weights, bf16 output (default out_dtype) ---
    N2, D_in2, D_out2 = 200, 64, 48
    x2 = jax.random.normal(kx2, (N2, D_in2), jnp.float32)
    W2, b2vec = init_siren_params(kp2, D_in2, D_out2, is_first=False, omega_0=omega_0)
    w2_t, b2b = prepare_siren_params(W2, b2vec, omega_0=omega_0, compute_dtype=jnp.bfloat16)
    out2 = jax.block_until_ready(siren_layer(x2, w2_t, b2b))
    assert out2.dtype == jnp.bfloat16
    w2_f = (W2 * omega_0).T.astype(jnp.bfloat16).astype(jnp.float32)
    ref2 = jnp.sin(x2.astype(jnp.bfloat16).astype(jnp.float32) @ w2_f + omega_0 * b2vec)
    np.testing.assert_allclose(np.asarray(out2, dtype=np.float32), np.asarray(ref2),
                               atol=1.5e-2, rtol=0)

    # --- Case C: hidden layer, no bias, ragged N vs block_m (masked last block) -
    N3, D_in3, D_out3 = 200, 64, 32
    x3 = jax.random.normal(kx3, (N3, D_in3), jnp.float32)
    W3, _ = init_siren_params(kp3, D_in3, D_out3, is_first=False, omega_0=omega_0)
    w3_t, _ = prepare_siren_params(W3, None, omega_0=omega_0, compute_dtype=jnp.float32)
    out3 = jax.block_until_ready(siren_layer(x3, w3_t, None, block_m=128))
    ref3 = jnp.sin(omega_0 * (x3 @ W3.T))
    np.testing.assert_allclose(np.asarray(out3), np.asarray(ref3), atol=1e-4, rtol=1e-4)

    print("KERNEL_OK")
</pallas_src>

<mosaic_0001>
module attributes {stable_mosaic.version = 11 : i64} {
  func.func @_siren_kernel_bias(%arg0: i32, %arg1: i32, %arg2: memref<64x3xf32, #tpu.memory_space<vmem>>, %arg3: memref<3x64xf32, #tpu.memory_space<vmem>>, %arg4: memref<1x64xf32, #tpu.memory_space<vmem>>, %arg5: memref<64x64xf32, #tpu.memory_space<vmem>>) attributes {dimension_semantics = [#tpu.dimension_semantics<parallel>, #tpu.dimension_semantics<parallel>], iteration_bounds = array<i64: 1, 1>, scalar_prefetch = 0 : i64, scratch_operands = 0 : i64, tpu.core_type = #tpu.core_type<tc>, window_params = [{transform_indices = @transform_0, window_bounds = array<i64: 64, 3>}, {transform_indices = @transform_1, window_bounds = array<i64: 3, 64>}, {transform_indices = @transform_2, window_bounds = array<i64: 1, 64>}, {transform_indices = @transform_3, window_bounds = array<i64: 64, 64>}]} {
    %c0 = arith.constant 0 : index
    %c0_0 = arith.constant 0 : index
    %0 = vector.load %arg2[%c0, %c0_0] : memref<64x3xf32, #tpu.memory_space<vmem>>, vector<64x3xf32>
    %c0_1 = arith.constant 0 : index
    %c0_2 = arith.constant 0 : index
    %1 = vector.load %arg3[%c0_1, %c0_2] : memref<3x64xf32, #tpu.memory_space<vmem>>, vector<3x64xf32>
    %cst = arith.constant dense<0.000000e+00> : vector<64x64xf32>
    %2 = tpu.matmul %0, %1, %cst {dimension_numbers = #tpu.dot_dimension_numbers<[1], [0], [0], [1], [0, 0, 1, 1], [], []>} : vector<64x3xf32>, vector<3x64xf32>, vector<64x64xf32> -> vector<64x64xf32>
    %c0_3 = arith.constant 0 : index
    %c0_4 = arith.constant 0 : index
    %3 = vector.load %arg4[%c0_3, %c0_4] : memref<1x64xf32, #tpu.memory_space<vmem>>, vector<1x64xf32>
    %4 = vector.broadcast %3 : vector<1x64xf32> to vector<64x64xf32>
    %5 = arith.addf %2, %4 : vector<64x64xf32>
    %cst_5 = arith.constant 0.318309873 : f32
    %6 = vector.broadcast %cst_5 : f32 to vector<64x64xf32>
    %7 = arith.mulf %5, %6 : vector<64x64xf32>
    %cst_6 = arith.constant 5.000000e-01 : f32
    %8 = vector.broadcast %cst_6 : f32 to vector<64x64xf32>
    %9 = arith.addf %7, %8 : vector<64x64xf32>
    %10 = math.floor %9 : vector<64x64xf32>
    %cst_7 = arith.constant 3.140625 : f32
    %11 = vector.broadcast %cst_7 : f32 to vector<64x64xf32>
    %12 = arith.mulf %10, %11 : vector<64x64xf32>
    %13 = arith.subf %5, %12 : vector<64x64xf32>
    %cst_8 = arith.constant 9.67653584E-4 : f32
    %14 = vector.broadcast %cst_8 : f32 to vector<64x64xf32>
    %15 = arith.mulf %10, %14 : vector<64x64xf32>
    %16 = arith.subf %13, %15 : vector<64x64xf32>
    %17 = arith.mulf %16, %16 : vector<64x64xf32>
    %cst_9 = arith.constant -2.50521079E-8 : f32
    %18 = vector.broadcast %cst_9 : f32 to vector<64x64xf32>
    %19 = arith.mulf %18, %17 : vector<64x64xf32>
    %cst_10 = arith.constant 2.75573188E-6 : f32
    %20 = vector.broadcast %cst_10 : f32 to vector<64x64xf32>
    %21 = arith.addf %19, %20 : vector<64x64xf32>
    %22 = arith.mulf %21, %17 : vector<64x64xf32>
    %cst_11 = arith.constant -1.98412701E-4 : f32
    %23 = vector.broadcast %cst_11 : f32 to vector<64x64xf32>
    %24 = arith.addf %22, %23 : vector<64x64xf32>
    %25 = arith.mulf %24, %17 : vector<64x64xf32>
    %cst_12 = arith.constant 0.00833333377 : f32
    %26 = vector.broadcast %cst_12 : f32 to vector<64x64xf32>
    %27 = arith.addf %25, %26 : vector<64x64xf32>
    %28 = arith.mulf %27, %17 : vector<64x64xf32>
    %cst_13 = arith.constant -0.166666672 : f32
    %29 = vector.broadcast %cst_13 : f32 to vector<64x64xf32>
    %30 = arith.addf %28, %29 : vector<64x64xf32>
    %31 = arith.mulf %17, %30 : vector<64x64xf32>
    %32 = arith.mulf %16, %31 : vector<64x64xf32>
    %33 = arith.addf %16, %32 : vector<64x64xf32>
    %cst_14 = arith.constant 5.000000e-01 : f32
    %34 = vector.broadcast %cst_14 : f32 to vector<64x64xf32>
    %35 = arith.mulf %10, %34 : vector<64x64xf32>
    %36 = math.floor %35 : vector<64x64xf32>
    %37 = arith.cmpf one, %35, %36 : vector<64x64xf32>
    %cst_15 = arith.constant 0.000000e+00 : f32
    %38 = vector.broadcast %cst_15 : f32 to vector<64x64xf32>
    %39 = arith.subf %38, %33 : vector<64x64xf32>
    %40 = arith.select %37, %39, %33 : vector<64x64xi1>, vector<64x64xf32>
    %c0_16 = arith.constant 0 : index
    %c0_17 = arith.constant 0 : index
    %41 = vector.load %arg5[%c0_16, %c0_17] : memref<64x64xf32, #tpu.memory_space<vmem>>, vector<64x64xf32>
    tpu.vector_store %arg5[%c0_16, %c0_17], %40 {strides = array<i32>} : memref<64x64xf32, #tpu.memory_space<vmem>>, vector<64x64xf32>,
    return
  }
  func.func @transform_0(%arg0: i32, %arg1: i32) -> (i32, i32) {
    %c0_i32 = arith.constant 0 : i32
    %c0_i32_0 = arith.constant 0 : i32
    return %arg0, %c0_i32 : i32, i32
  }
  func.func @transform_1(%arg0: i32, %arg1: i32) -> (i32, i32) {
    %c0_i32 = arith.constant 0 : i32
    %c0_i32_0 = arith.constant 0 : i32
    return %c0_i32, %arg1 : i32, i32
  }
  func.func @transform_2(%arg0: i32, %arg1: i32) -> (i32, i32) {
    %c0_i32 = arith.constant 0 : i32
    %c0_i32_0 = arith.constant 0 : i32
    return %c0_i32, %arg1 : i32, i32
  }
  func.func @transform_3(%arg0: i32, %arg1: i32) -> (i32, i32) {
    %c0_i32 = arith.constant 0 : i32
    return %arg0, %arg1 : i32, i32
  }
}

</mosaic_0001>

<llo_original>
// kernel: tpu_custom_call.1
$region0: #{tpu_custom_call.1}
  #allocation0 [shape = 'u32[]', space=smem, size = 0x4, offset = 0x4, fixed_abs, tag = 'smem constant byte address 0x4 - core index']
  #allocation1 [shape = 'u32[144,128]{1,0:T(1,128)}', space=vmem, size = 0x12000, scoped, tag = 'internal scratch']
  %s0 = inlined_call_operand.vmem [shape: f32[64,3], index: 0, kind: input, shape index: {}]
  %s1 = inlined_call_operand.vmem [shape: f32[3,64], index: 1, kind: input, shape index: {}]
  %s2 = inlined_call_operand.vmem [shape: f32[1,64], index: 2, kind: input, shape index: {}]
  %s3 = inlined_call_operand.hbm [shape: f32[64,64], index: 3, kind: output, shape index: {}]
  %s4 = sld [smem:[#allocation0]]
  $region22: #{tpu_custom_call.1} parent=0
    _
  %s6 = ssub.s32 1, %s4
  %s7 = scalar_select 0, %s6, %s4
  $region1: #{tpu_custom_call.1} parent=0
    #allocation2 [shape = 'u8[32768]{0}', space=vmem, size = 0x8000, scoped, tag = 'output window, operand 0, single buffered']
    #allocation3 [shape = 's32[1]{0}', space=sflag, size = 0x4, scoped, tag = 'scoped memory for tpu_custom_call.1']
    %8 = vsyncpa [#allocation3], 0
    // Predicated region
    $region2: #{tpu_custom_call.1} parent=1 // pred_check
      _
    $region3: #{tpu_custom_call.1} parent=1 // pred_check_branch
      %10 = sbr.rel (0) target = $region5
    $region4: #{tpu_custom_call.1} parent=1 // pred_region
      _
    $region5: #{tpu_custom_call.1} parent=1 // pred_fallthru
      _
    // Predicated region
    $region6: #{tpu_custom_call.1} parent=1 // pred_check
      _
    $region7: #{tpu_custom_call.1} parent=1 // pred_check_branch
      %12 = sbr.rel (0) target = $region9
    $region8: #{tpu_custom_call.1} parent=1 // pred_region
      _
    $region9: #{tpu_custom_call.1} parent=1 // pred_fallthru
      _
    // Predicated region
    $region10: #{tpu_custom_call.1} parent=1 // pred_check
      _
    $region11: #{tpu_custom_call.1} parent=1 // pred_check_branch
      %14 = sbr.rel (0) target = $region13
    $region12: #{tpu_custom_call.1} parent=1 // pred_region
      _
    $region13: #{tpu_custom_call.1} parent=1 // pred_fallthru
      _
    %v15 = vld [vmem:[%s0] sm:$0xff]
    %v16 = vld [vmem:[%s0 + $0x8] sm:$0xff]
    %v17 = vld [vmem:[%s0 + $0x10] sm:$0xff]
    %v18 = vld [vmem:[%s0 + $0x18] sm:$0xff]
    %v19 = vld [vmem:[%s0 + $0x20] sm:$0xff]
    %v20 = vld [vmem:[%s0 + $0x28] sm:$0xff]
    %v21 = vld [vmem:[%s0 + $0x30] sm:$0xff]
    %v22 = vld [vmem:[%s0 + $0x38] sm:$0xff]
    %v23 = vld [vmem:[%s1] sm:$0x7]
    %v24 = vld [vmem:[%s2] sm:$0x1]
    %v26 = vlaneseq
    %v27 = vshrl.u32 %v26, 7
    %v28 = vsub.s32 0, %v27
    %v29 = vrot.slane %v24, %v28
    %vm31 = vcmask 23552
    %v33 = vsel %vm31, %v15, 0
    %v36 = vsel %vm31, %v16, 0
    %v39 = vsel %vm31, %v17, 0
    %v42 = vsel %vm31, %v18, 0
    %v45 = vsel %vm31, %v19, 0
    %v48 = vsel %vm31, %v20, 0
    %v51 = vsel %vm31, %v21, 0
    %v54 = vsel %vm31, %v22, 0
    %vm56 = vcmask 1042432
    %v58 = vsel %vm56, %v23, 0
    %60 = vmatprep.subr.mxu0 0.0
    %61 = vmatpush1.msra.mxu0 0.0
    %62 = vmatprep.subr.mxu0 0.0
    %63 = vmatpush1.msra.mxu0 0.0
    %64 = vmatprep.subr.mxu0 0.0
    %65 = vmatpush1.msra.mxu0 0.0
    %66 = vmatprep.subr.mxu0 0.0
    %67 = vmatpush1.msra.mxu0 0.0
    %68 = vmatprep.subr.mxu0 0.0
    %69 = vmatpush1.msra.mxu0 0.0
    %70 = vmatprep.subr.mxu0 0.0
    %71 = vmatpush1.msra.mxu0 0.0
    %72 = vmatprep.subr.mxu0 0.0
    %73 = vmatpush1.msra.mxu0 0.0
    %74 = vmatprep.subr.mxu0 0.0
    %75 = vmatpush1.msra.mxu0 0.0
    %76 = vmatprep.subr.mxu0 0.0
    %77 = vmatpush1.msra.mxu0 0.0
    %78 = vmatprep.subr.mxu0 0.0
    %79 = vmatpush1.msra.mxu0 0.0
    %80 = vmatprep.subr.mxu0 0.0
    %81 = vmatpush1.msra.mxu0 0.0
    %82 = vmatprep.subr.mxu0 0.0
    %83 = vmatpush1.msra.mxu0 0.0
    %84 = vmatprep.subr.mxu0 0.0
    %85 = vmatpush1.msra.mxu0 0.0
    %86 = vmatprep.subr.mxu0 0.0
    %87 = vmatpush1.msra.mxu0 0.0
    %88 = vmatprep.subr.mxu0 0.0
    %89 = vmatpush1.msra.mxu0 0.0
    %90 = vmatprep.subr.mxu0 0.0
    %91 = vmatpush1.msra.mxu0 %v58
    %92 = vmatprep.subr.mxu0 0.0
    %93 = vmatpush2.msra.mxu0 0.0
    %94 = vmatprep.subr.mxu0 0.0
    %95 = vmatpush2.msra.mxu0 0.0
    %96 = vmatprep.subr.mxu0 0.0
    %97 = vmatpush2.msra.mxu0 0.0
    %98 = vmatprep.subr.mxu0 0.0
    %99 = vmatpush2.msra.mxu0 0.0
    %100 = vmatprep.subr.mxu0 0.0
    %101 = vmatpush2.msra.mxu0 0.0
    %102 = vmatprep.subr.mxu0 0.0
    %103 = vmatpush2.msra.mxu0 0.0
    %104 = vmatprep.subr.mxu0 0.0
    %105 = vmatpush2.msra.mxu0 0.0
    %106 = vmatprep.subr.mxu0 0.0
    %107 = vmatpush2.msra.mxu0 0.0
    %108 = vmatprep.subr.mxu0 0.0
    %109 = vmatpush2.msra.mxu0 0.0
    %110 = vmatprep.subr.mxu0 0.0
    %111 = vmatpush2.msra.mxu0 0.0
    %112 = vmatprep.subr.mxu0 0.0
    %113 = vmatpush2.msra.mxu0 0.0
    %114 = vmatprep.subr.mxu0 0.0
    %115 = vmatpush2.msra.mxu0 0.0
    %116 = vmatprep.subr.mxu0 0.0
    %117 = vmatpush2.msra.mxu0 0.0
    %118 = vmatprep.subr.mxu0 0.0
    %119 = vmatpush2.msra.mxu0 0.0
    %120 = vmatprep.subr.mxu0 0.0
    %121 = vmatpush2.msra.mxu0 0.0
    %122 = vmatprep.subr.mxu0 0.0
    %123 = vmatpush2.msra.mxu0 0.0
    %124 = vmatprep.mubr.f32.mxu0 0.0
    %125 = vmatmul.mubr.f32.gmra.mxu0 %v33
    %v126 = vpop.f32.mrf.mxu0
    %v127 = vadd.f32 %v29, %v126
    %v128 = vpop.f32.mrf.mxu0
    %129 = vmatprep.mubr.f32.mxu0 0.0
    %130 = vmatmul.mubr.f32.gmra.mxu0 %v36
    %v131 = vpop.f32.mrf.mxu0
    %v132 = vadd.f32 %v29, %v131
    %v133 = vpop.f32.mrf.mxu0
    %134 = vmatprep.mubr.f32.mxu0 0.0
    %135 = vmatmul.mubr.f32.gmra.mxu0 %v39
    %v136 = vpop.f32.mrf.mxu0
    %v137 = vadd.f32 %v29, %v136
    %v138 = vpop.f32.mrf.mxu0
    %139 = vmatprep.mubr.f32.mxu0 0.0
    %140 = vmatmul.mubr.f32.gmra.mxu0 %v42
    %v141 = vpop.f32.mrf.mxu0
    %v142 = vadd.f32 %v29, %v141
    %v143 = vpop.f32.mrf.mxu0
    %144 = vmatprep.mubr.f32.mxu0 0.0
    %145 = vmatmul.mubr.f32.gmra.mxu0 %v45
    %v146 = vpop.f32.mrf.mxu0
    %v147 = vadd.f32 %v29, %v146
    %v148 = vpop.f32.mrf.mxu0
    %149 = vmatprep.mubr.f32.mxu0 0.0
    %150 = vmatmul.mubr.f32.gmra.mxu0 %v48
    %v151 = vpop.f32.mrf.mxu0
    %v152 = vadd.f32 %v29, %v151
    %v153 = vpop.f32.mrf.mxu0
    %154 = vmatprep.mubr.f32.mxu0 0.0
    %155 = vmatmul.mubr.f32.gmra.mxu0 %v51
    %v156 = vpop.f32.mrf.mxu0
    %v157 = vadd.f32 %v29, %v156
    %v158 = vpop.f32.mrf.mxu0
    %159 = vmatprep.mubr.f32.mxu0 0.0
    %160 = vmatmul.mubr.f32.gmra.mxu0 %v54
    %v161 = vpop.f32.mrf.mxu0
    %v162 = vadd.f32 %v29, %v161
    %v163 = vpop.f32.mrf.mxu0
    %164 = vdwg.mxu0
    %v165 = vmul.f32 %v127, 0.31830987
    %v166 = vmul.f32 %v132, 0.31830987
    %v167 = vmul.f32 %v137, 0.31830987
    %v168 = vmul.f32 %v142, 0.31830987
    %v169 = vmul.f32 %v147, 0.31830987
    %v170 = vmul.f32 %v152, 0.31830987
    %v171 = vmul.f32 %v157, 0.31830987
    %v172 = vmul.f32 %v162, 0.31830987
    %v173 = vadd.f32 %v165, 0.5
    %v174 = vadd.f32 %v166, 0.5
    %v175 = vadd.f32 %v167, 0.5
    %v176 = vadd.f32 %v168, 0.5
    %v177 = vadd.f32 %v169, 0.5
    %v178 = vadd.f32 %v170, 0.5
    %v179 = vadd.f32 %v171, 0.5
    %v180 = vadd.f32 %v172, 0.5
    %v181 = vfloor.f32 %v173
    %v182 = vfloor.f32 %v174
    %v183 = vfloor.f32 %v175
    %v184 = vfloor.f32 %v176
    %v185 = vfloor.f32 %v177
    %v186 = vfloor.f32 %v178
    %v187 = vfloor.f32 %v179
    %v188 = vfloor.f32 %v180
    %v189 = vmul.f32 %v181, 3.140625
    %v190 = vmul.f32 %v182, 3.140625
    %v191 = vmul.f32 %v183, 3.140625
    %v192 = vmul.f32 %v184, 3.140625
    %v193 = vmul.f32 %v185, 3.140625
    %v194 = vmul.f32 %v186, 3.140625
    %v195 = vmul.f32 %v187, 3.140625
    %v196 = vmul.f32 %v188, 3.140625
    %v197 = vsub.f32 %v127, %v189
    %v198 = vsub.f32 %v132, %v190
    %v199 = vsub.f32 %v137, %v191
    %v200 = vsub.f32 %v142, %v192
    %v201 = vsub.f32 %v147, %v193
    %v202 = vsub.f32 %v152, %v194
    %v203 = vsub.f32 %v157, %v195
    %v204 = vsub.f32 %v162, %v196
    %v205 = vmul.f32 %v181, 0.0009676536
    %v206 = vmul.f32 %v182, 0.0009676536
    %v207 = vmul.f32 %v183, 0.0009676536
    %v208 = vmul.f32 %v184, 0.0009676536
    %v209 = vmul.f32 %v185, 0.0009676536
    %v210 = vmul.f32 %v186, 0.0009676536
    %v211 = vmul.f32 %v187, 0.0009676536
    %v212 = vmul.f32 %v188, 0.0009676536
    %v213 = vsub.f32 %v197, %v205
    %v214 = vsub.f32 %v198, %v206
    %v215 = vsub.f32 %v199, %v207
    %v216 = vsub.f32 %v200, %v208
    %v217 = vsub.f32 %v201, %v209
    %v218 = vsub.f32 %v202, %v210
    %v219 = vsub.f32 %v203, %v211
    %v220 = vsub.f32 %v204, %v212
    %v221 = vmul.f32 %v213, %v213
    %v222 = vmul.f32 %v214, %v214
    %v223 = vmul.f32 %v215, %v215
    %v224 = vmul.f32 %v216, %v216
    %v225 = vmul.f32 %v217, %v217
    %v226 = vmul.f32 %v218, %v218
    %v227 = vmul.f32 %v219, %v219
    %v228 = vmul.f32 %v220, %v220
    %v229 = vmul.f32 %v221, -2.5052108e-08
    %v230 = vmul.f32 %v222, -2.5052108e-08
    %v231 = vmul.f32 %v223, -2.5052108e-08
    %v232 = vmul.f32 %v224, -2.5052108e-08
    %v233 = vmul.f32 %v225, -2.5052108e-08
    %v234 = vmul.f32 %v226, -2.5052108e-08
    %v235 = vmul.f32 %v227, -2.5052108e-08
    %v236 = vmul.f32 %v228, -2.5052108e-08
    %v237 = vadd.f32 %v229, 2.7557319e-06
    %v238 = vadd.f32 %v230, 2.7557319e-06
    %v239 = vadd.f32 %v231, 2.7557319e-06
    %v240 = vadd.f32 %v232, 2.7557319e-06
    %v241 = vadd.f32 %v233, 2.7557319e-06
    %v242 = vadd.f32 %v234, 2.7557319e-06
    %v243 = vadd.f32 %v235, 2.7557319e-06
    %v244 = vadd.f32 %v236, 2.7557319e-06
    %v245 = vmul.f32 %v237, %v221
    %v246 = vmul.f32 %v238, %v222
    %v247 = vmul.f32 %v239, %v223
    %v248 = vmul.f32 %v240, %v224
    %v249 = vmul.f32 %v241, %v225
    %v250 = vmul.f32 %v242, %v226
    %v251 = vmul.f32 %v243, %v227
    %v252 = vmul.f32 %v244, %v228
    %v253 = vadd.f32 %v245, -0.0001984127
    %v254 = vadd.f32 %v246, -0.0001984127
    %v255 = vadd.f32 %v247, -0.0001984127
    %v256 = vadd.f32 %v248, -0.0001984127
    %v257 = vadd.f32 %v249, -0.0001984127
    %v258 = vadd.f32 %v250, -0.0001984127
    %v259 = vadd.f32 %v251, -0.0001984127
    %v260 = vadd.f32 %v252, -0.0001984127
    %v261 = vmul.f32 %v253, %v221
    %v262 = vmul.f32 %v254, %v222
    %v263 = vmul.f32 %v255, %v223
    %v264 = vmul.f32 %v256, %v224
    %v265 = vmul.f32 %v257, %v225
    %v266 = vmul.f32 %v258, %v226
    %v267 = vmul.f32 %v259, %v227
    %v268 = vmul.f32 %v260, %v228
    %v269 = vadd.f32 %v261, 0.008333334
    %v270 = vadd.f32 %v262, 0.008333334
    %v271 = vadd.f32 %v263, 0.008333334
    %v272 = vadd.f32 %v264, 0.008333334
    %v273 = vadd.f32 %v265, 0.008333334
    %v274 = vadd.f32 %v266, 0.008333334
    %v275 = vadd.f32 %v267, 0.008333334
    %v276 = vadd.f32 %v268, 0.008333334
    %v277 = vmul.f32 %v269, %v221
    %v278 = vmul.f32 %v270, %v222
    %v279 = vmul.f32 %v271, %v223
    %v280 = vmul.f32 %v272, %v224
    %v281 = vmul.f32 %v273, %v225
    %v282 = vmul.f32 %v274, %v226
    %v283 = vmul.f32 %v275, %v227
    %v284 = vmul.f32 %v276, %v228
    %v285 = vadd.f32 %v277, -0.16666667
    %v286 = vadd.f32 %v278, -0.16666667
    %v287 = vadd.f32 %v279, -0.16666667
    %v288 = vadd.f32 %v280, -0.16666667
    %v289 = vadd.f32 %v281, -0.16666667
    %v290 = vadd.f32 %v282, -0.16666667
    %v291 = vadd.f32 %v283, -0.16666667
    %v292 = vadd.f32 %v284, -0.16666667
    %v293 = vmul.f32 %v221, %v285
    %v294 = vmul.f32 %v222, %v286
    %v295 = vmul.f32 %v223, %v287
    %v296 = vmul.f32 %v224, %v288
    %v297 = vmul.f32 %v225, %v289
    %v298 = vmul.f32 %v226, %v290
    %v299 = vmul.f32 %v227, %v291
    %v300 = vmul.f32 %v228, %v292
    %v301 = vmul.f32 %v213, %v293
    %v302 = vmul.f32 %v214, %v294
    %v303 = vmul.f32 %v215, %v295
    %v304 = vmul.f32 %v216, %v296
    %v305 = vmul.f32 %v217, %v297
    %v306 = vmul.f32 %v218, %v298
    %v307 = vmul.f32 %v219, %v299
    %v308 = vmul.f32 %v220, %v300
    %v309 = vadd.f32 %v213, %v301
    %v310 = vadd.f32 %v214, %v302
    %v311 = vadd.f32 %v215, %v303
    %v312 = vadd.f32 %v216, %v304
    %v313 = vadd.f32 %v217, %v305
    %v314 = vadd.f32 %v218, %v306
    %v315 = vadd.f32 %v219, %v307
    %v316 = vadd.f32 %v220, %v308
    %v317 = vmul.f32 %v181, 0.5
    %v318 = vmul.f32 %v182, 0.5
    %v319 = vmul.f32 %v183, 0.5
    %v320 = vmul.f32 %v184, 0.5
    %v321 = vmul.f32 %v185, 0.5
    %v322 = vmul.f32 %v186, 0.5
    %v323 = vmul.f32 %v187, 0.5
    %v324 = vmul.f32 %v188, 0.5
    %v325 = vfloor.f32 %v317
    %v326 = vfloor.f32 %v318
    %v327 = vfloor.f32 %v319
    %v328 = vfloor.f32 %v320
    %v329 = vfloor.f32 %v321
    %v330 = vfloor.f32 %v322
    %v331 = vfloor.f32 %v323
    %v332 = vfloor.f32 %v324
    %vm333 = vcmp.ne.f32.partialorder %v317, %v325
    %vm334 = vcmp.ne.f32.partialorder %v318, %v326
    %vm335 = vcmp.ne.f32.partialorder %v319, %v327
    %vm336 = vcmp.ne.f32.partialorder %v320, %v328
    %vm337 = vcmp.ne.f32.partialorder %v321, %v329
    %vm338 = vcmp.ne.f32.partialorder %v322, %v330
    %vm339 = vcmp.ne.f32.partialorder %v323, %v331
    %vm340 = vcmp.ne.f32.partialorder %v324, %v332
    %v341 = vsub.f32 0.0, %v309
    %v342 = vsub.f32 0.0, %v310
    %v343 = vsub.f32 0.0, %v311
    %v344 = vsub.f32 0.0, %v312
    %v345 = vsub.f32 0.0, %v313
    %v346 = vsub.f32 0.0, %v314
    %v347 = vsub.f32 0.0, %v315
    %v348 = vsub.f32 0.0, %v316
    %v349 = vsel %vm333, %v341, %v309
    %v350 = vsel %vm334, %v342, %v310
    %v351 = vsel %vm335, %v343, %v311
    %v352 = vsel %vm336, %v344, %v312
    %v353 = vsel %vm337, %v345, %v313
    %v354 = vsel %vm338, %v346, %v314
    %v355 = vsel %vm339, %v347, %v315
    %v356 = vsel %vm340, %v348, %v316
    %vm357 = vcmask 523264
    %358 = vst.msk [vmem:[#allocation2] sm:$0xff] %vm357, %v349
    %359 = vst.msk [vmem:[#allocation2 + $0x8] sm:$0xff] %vm357, %v350
    %360 = vst.msk [vmem:[#allocation2 + $0x10] sm:$0xff] %vm357, %v351
    %361 = vst.msk [vmem:[#allocation2 + $0x18] sm:$0xff] %vm357, %v352
    %362 = vst.msk [vmem:[#allocation2 + $0x20] sm:$0xff] %vm357, %v353
    %363 = vst.msk [vmem:[#allocation2 + $0x28] sm:$0xff] %vm357, %v354
    %364 = vst.msk [vmem:[#allocation2 + $0x30] sm:$0xff] %vm357, %v355
    %365 = vst.msk [vmem:[#allocation2 + $0x38] sm:$0xff] %vm357, %v356
    // Predicated region
    $region14: #{tpu_custom_call.1} parent=1 // pred_check
      _
    $region15: #{tpu_custom_call.1} parent=1 // pred_check_branch
      %367 = sbr.rel (0) target = $region17
    $region16: #{tpu_custom_call.1} parent=1 // pred_region
      %s369 = ssub.s32 1024, 1024
      %370 = vsyncadd [#allocation3], %s369
      %s371 = sshll.u32 [#allocation2], 4
      %s372 = int_to_ptr.vmem [resolvable:$true] %s371
      %377 = dma.vmem_to_hbm [thread:$0]  %s372, 1024, %s3, [#allocation3], 128, 128, 8
    $region17: #{tpu_custom_call.1} parent=1 // pred_fallthru
      _
    // Predicated region
    $region18: #{tpu_custom_call.1} parent=1 // pred_check
      _
    $region19: #{tpu_custom_call.1} parent=1 // pred_check_branch
      %379 = sbr.rel (0) target = $region21
    $region20: #{tpu_custom_call.1} parent=1 // pred_region
      %380 = dma.done [#allocation3], 1024
    $region21: #{tpu_custom_call.1} parent=1 // pred_fallthru
      _
    %381 = vsyncpa [#allocation3], 1

</llo_original>
